<compile_context>
chip_gen: v7x
topology: tpu7x:2x2x1
jax: 0.10.0
libtpu: 0.0.40
codegen_flags: <defaults>
</compile_context>

<pallas_src>
import jax
import jax.numpy as jnp
from jax import lax
from jax.experimental import pallas as pl
from jax.experimental.pallas import tpu as pltpu


_F32 = jnp.float32
# Contract the last (hidden) dim of both 2-D operands: (M,H) x (N,H) -> (M,N).
_CONTRACT_LAST = (((1,), (1,)), ((), ()))


def _softmax_rows(scores):
    """Numerically-stable softmax over the last axis of a (Bt, L) f32 tile.

    Exact divide: attention rows must sum to 1 (the approximate reciprocal
    only normalizes to ~1e-3)."""
    m = jnp.max(scores, axis=-1, keepdims=True)
    ex = jnp.exp(scores - m)
    return ex / jnp.sum(ex, axis=-1, keepdims=True)


# ---------------------------------------------------------------------------
# Kernels: one grid step == one tile of Bt batch rows.
#   hidden_ref : (Bt, 1, H)  matmul dtype
#   enc_ref    : (Bt, L, H)  matmul dtype
#   out_ref    : (Bt, 1, L)  f32
# ---------------------------------------------------------------------------

def _dot_kernel(hidden_ref, enc_ref, out_ref):
    h = hidden_ref[...][:, 0, :].astype(_F32)                       # (Bt, H)
    e = enc_ref[...].astype(_F32)                                   # (Bt, L, H)
    # Memory-bound variant: plain VPU multiply + lane reduce, no MXU needed.
    scores = jnp.sum(h[:, None, :] * e, axis=-1)                    # (Bt, L)
    out_ref[...] = _softmax_rows(scores)[:, None, :].astype(out_ref.dtype)


def _general_kernel(hidden_ref, enc_ref, w_ref, b_ref, out_ref):
    h = hidden_ref[...][:, 0, :]                                    # (Bt, H) matmul dtype
    e = enc_ref[...].astype(_F32)                                   # (Bt, L, H) f32
    w = w_ref[...]                                                  # (H, H) torch Linear weight (out, in)
    bias = b_ref[...].astype(_F32)                                  # (1, H)
    # Algebraic hoist: sum_o h_o * (e @ W^T + b)_o == e . (h @ W) + h . b
    # -> one (Bt,H)x(H,H) MXU matmul instead of L of them, and no (Bt,L,H)
    #    f32 energy intermediate.
    hw = jnp.dot(h, w, preferred_element_type=_F32)                 # (Bt, H)
    hb = jnp.sum(h.astype(_F32) * bias, axis=-1, keepdims=True)     # (Bt, 1)
    scores = jnp.sum(hw[:, None, :] * e, axis=-1) + hb              # (Bt, L)
    out_ref[...] = _softmax_rows(scores)[:, None, :].astype(out_ref.dtype)


def _concat_kernel(hidden_ref, enc_ref, wh_ref, we_ref, b_ref, v_ref, out_ref):
    bt, l, hdim = enc_ref.shape
    h = hidden_ref[...][:, 0, :]                                    # (Bt, H)
    # cat([hidden.expand(L,..), enc], -1) @ W^T == h @ Wh^T + e @ We^T
    # Flatten the encoder operand so the MXU sees one tall (Bt*L, H) matmul
    # (better systolic occupancy than Bt separate pushes).
    e_flat = enc_ref[...].reshape(bt * l, hdim)                     # (Bt*L, H)
    hid_part = lax.dot_general(h, wh_ref[...], _CONTRACT_LAST,
                               preferred_element_type=_F32)         # (Bt, H)
    enc_part = lax.dot_general(e_flat, we_ref[...], _CONTRACT_LAST,
                               preferred_element_type=_F32)         # (Bt*L, H)
    energy = jnp.tanh(enc_part.reshape(bt, l, hdim)
                      + hid_part[:, None, :]
                      + b_ref[...].astype(_F32))                    # (Bt, L, H) f32
    scores = jnp.sum(v_ref[...].astype(_F32) * energy, axis=-1)     # (Bt, L)
    out_ref[...] = _softmax_rows(scores)[:, None, :].astype(out_ref.dtype)


# ---------------------------------------------------------------------------
# Wrapper
# ---------------------------------------------------------------------------

def _const_spec(shape, single_buffer):
    """Full-extent spec for a weight that is constant across the grid."""
    index_map = lambda *_: (0,) * len(shape)
    if single_buffer and hasattr(pl, "Buffered"):
        # Constant index_map -> never re-fetched: a single pipeline buffer
        # saves the default second copy's VMEM (headroom for a bigger Bt).
        return pl.BlockSpec(shape, index_map, pipeline_mode=pl.Buffered(1))
    return pl.BlockSpec(shape, index_map)


class AttnPallas:
    """Pallas port of the PyTorch `Attn` module (Luong attention scores)."""

    def __init__(self, method, hidden_size, key, *,
                 matmul_dtype=jnp.bfloat16, batch_tile=8):
        if method not in ('dot', 'general', 'concat'):
            raise ValueError(method, 'is not an appropriate attention method.')
        self.method = method
        self.hidden_size = hidden_size
        # bf16 MXU operands halve HBM bytes on this memory-bound kernel; all
        # softmax/tanh/bias math stays f32.  Pass jnp.float32 for a bit-faithful
        # reproduction of the PyTorch module.
        self.matmul_dtype = matmul_dtype
        # Batch rows per grid step (multiple of 8 fills f32 sublanes).  On v7x
        # pick batch_tile <= B // 2 so the grid keeps >= 2 steps for the 2 TCs
        # and budget tiles for 64 MiB VMEM; on v5e/v6e prefer the largest tile
        # that fits VMEM (extra grid steps there are pure overhead).
        self.batch_tile = batch_tile
        H = hidden_size
        k_w, k_b, k_v = jax.random.split(key, 3)
        if method == 'general':
            bound = 1.0 / (H ** 0.5)
            self.w = jax.random.uniform(k_w, (H, H), _F32, -bound, bound)
            self.b = jax.random.uniform(k_b, (1, H), _F32, -bound, bound)
        elif method == 'concat':
            bound = 1.0 / ((2 * H) ** 0.5)
            self.w = jax.random.uniform(k_w, (H, 2 * H), _F32, -bound, bound)
            self.b = jax.random.uniform(k_b, (1, H), _F32, -bound, bound)
            self.v = jax.random.normal(k_v, (1, H), _F32)

    def __call__(self, hidden, encoder_outputs):
        L, B, H = encoder_outputs.shape
        cd = self.matmul_dtype
        Bt = max(1, min(self.batch_tile, B))
        grid = (pl.cdiv(B, Bt),)

        # Single fused relayout pass per tensor (transpose + cast).  No lane
        # padding of the big encoder tensor: the kernel block keeps the full
        # (L, H) trailing extent, and the (B, 1, L) output needs no mask.
        hidden_r = jnp.transpose(hidden, (1, 0, 2)).astype(cd)            # (B, 1, H)
        enc_r = jnp.transpose(encoder_outputs, (1, 0, 2)).astype(cd)      # (B, L, H)

        hid_spec = pl.BlockSpec((Bt, 1, H), lambda i: (i, 0, 0))
        enc_spec = pl.BlockSpec((Bt, L, H), lambda i: (i, 0, 0))
        out_spec = pl.BlockSpec((Bt, 1, L), lambda i: (i, 0, 0))

        if self.method == 'dot':
            kernel = _dot_kernel
            consts = ()
        elif self.method == 'general':
            kernel = _general_kernel
            consts = (self.w.astype(cd), self.b)
        else:  # concat: split W once in the wrapper so the kernel avoids lane slicing.
            kernel = _concat_kernel
            consts = (self.w[:, :H].astype(cd), self.w[:, H:].astype(cd),
                      self.b, self.v)
        args = (hidden_r, enc_r) + consts

        # Explicit VMEM budget: double-buffered hidden/enc/out tiles + weights.
        # (v5e's default scoped limit is 16 MiB; keep headroom under v7x's
        # 64 MiB physical VMEM when raising Bt.)
        itemsize = jnp.finfo(cd).bits // 8
        tile_bytes = 2 * Bt * (L * H + H) * itemsize + 2 * Bt * L * 4
        const_bytes = sum(int(c.size) * c.dtype.itemsize for c in consts)
        vmem_limit_bytes = int(min(100 * 2 ** 20,
                                   max(32 * 2 ** 20,
                                       4 * (tile_bytes + 2 * const_bytes))))
        compiler_params = pltpu.CompilerParams(
            dimension_semantics=("parallel",),   # shard batch steps across TCs (v7x)
            vmem_limit_bytes=vmem_limit_bytes)

        def build(single_buffer_consts):
            in_specs = [hid_spec, enc_spec] + [
                _const_spec(tuple(c.shape), single_buffer_consts) for c in consts]
            return pl.pallas_call(
                kernel,
                out_shape=jax.ShapeDtypeStruct((B, 1, L), _F32),
                grid=grid,
                in_specs=in_specs,
                out_specs=out_spec,
                compiler_params=compiler_params,
            )

        try:
            return build(True)(*args)
        except Exception:
            # This Pallas build rejects pipeline_mode=pl.Buffered(1); fall back
            # to default (double-buffered) constant weights.
            return build(False)(*args)


# ---------------------------------------------------------------------------
# Pure-JAX reference (mirrors the PyTorch module; matmul operands cast the
# same way as the kernel so both dtype modes can be checked tightly).
# ---------------------------------------------------------------------------

def _reference(method, module, hidden, enc, matmul_dtype):
    cast = lambda x: x.astype(matmul_dtype).astype(_F32)
    hidden = cast(hidden)
    enc = cast(enc)
    if method == 'dot':
        scores = jnp.sum(hidden * enc, axis=2)
    elif method == 'general':
        energy = jnp.einsum('lbh,oh->lbo', enc, cast(module.w)) + module.b[0]
        scores = jnp.sum(hidden * energy, axis=2)
    else:
        cat = jnp.concatenate([jnp.broadcast_to(hidden, enc.shape), enc], axis=2)
        energy = jnp.tanh(jnp.einsum('lbc,oc->lbo', cat, cast(module.w)) + module.b[0])
        scores = jnp.sum(module.v[0] * energy, axis=2)
    return jax.nn.softmax(scores.T, axis=1)[:, None, :]


# ---------------------------------------------------------------------------
# Main
# ---------------------------------------------------------------------------

if __name__ == "__main__":
    key = jax.random.PRNGKey(0)
    k_h, k_e, k_p = jax.random.split(key, 3)

    def check(B, L, H, batch_tile, matmul_dtype, tol):
        hidden = jax.random.normal(k_h, (1, B, H), _F32)
        encoder_outputs = jax.random.normal(k_e, (L, B, H), _F32)
        for method in ('dot', 'general', 'concat'):
            attn = AttnPallas(method, H, k_p,
                              matmul_dtype=matmul_dtype, batch_tile=batch_tile)
            out = jax.block_until_ready(attn(hidden, encoder_outputs))
            assert out.shape == (B, 1, L), (method, out.shape)
            ref = _reference(method, attn, hidden, encoder_outputs, matmul_dtype)
            assert jnp.allclose(out, ref, atol=tol, rtol=tol), (method, str(matmul_dtype))
            # Exact-divide softmax: rows must sum to 1 tightly.
            assert jnp.allclose(jnp.sum(out, axis=-1), 1.0, atol=1e-4), (method, str(matmul_dtype))

    # Faithful f32 path and the bf16-MXU fast path (single grid step).
    check(B=2, L=8, H=32, batch_tile=8, matmul_dtype=jnp.float32, tol=2e-3)
    check(B=2, L=8, H=32, batch_tile=8, matmul_dtype=jnp.bfloat16, tol=2e-3)
    # Multi-step batched grid (grid = 2) exercising the Bt-row batch tiling.
    check(B=16, L=8, H=32, batch_tile=8, matmul_dtype=jnp.bfloat16, tol=2e-3)

    print("KERNEL_OK")
</pallas_src>

<mosaic_0001>
module attributes {stable_mosaic.version = 11 : i64} {
  func.func @_dot_kernel(%arg0: i32, %arg1: memref<2x1x32xf32, #tpu.memory_space<vmem>>, %arg2: memref<2x8x32xf32, #tpu.memory_space<vmem>>, %arg3: memref<2x1x8xf32, #tpu.memory_space<vmem>>) attributes {dimension_semantics = [#tpu.dimension_semantics<parallel>], iteration_bounds = array<i64: 1>, scalar_prefetch = 0 : i64, scratch_operands = 0 : i64, tpu.core_type = #tpu.core_type<tc>, window_params = [{transform_indices = @transform_0, window_bounds = array<i64: 2, 1, 32>}, {transform_indices = @transform_1, window_bounds = array<i64: 2, 8, 32>}, {transform_indices = @transform_2, window_bounds = array<i64: 2, 1, 8>}]} {
    %c0 = arith.constant 0 : index
    %c0_0 = arith.constant 0 : index
    %c0_1 = arith.constant 0 : index
    %0 = vector.load %arg1[%c0, %c0_0, %c0_1] : memref<2x1x32xf32, #tpu.memory_space<vmem>>, vector<2x1x32xf32>
    %1 = vector.shape_cast %0 : vector<2x1x32xf32> to vector<2x32xf32>
    %c0_2 = arith.constant 0 : index
    %c0_3 = arith.constant 0 : index
    %c0_4 = arith.constant 0 : index
    %2 = vector.load %arg2[%c0_2, %c0_3, %c0_4] : memref<2x8x32xf32, #tpu.memory_space<vmem>>, vector<2x8x32xf32>
    %3 = vector.shape_cast %1 : vector<2x32xf32> to vector<2x1x32xf32>
    %4 = vector.broadcast %3 : vector<2x1x32xf32> to vector<2x8x32xf32>
    %5 = arith.mulf %4, %2 : vector<2x8x32xf32>
    %cst = arith.constant dense<0.000000e+00> : vector<2x8xf32>
    %6 = vector.multi_reduction <add>, %5, %cst [2] : vector<2x8x32xf32> to vector<2x8xf32>
    %cst_5 = arith.constant dense<0xFF800000> : vector<2xf32>
    %7 = vector.multi_reduction <maximumf>, %6, %cst_5 [1] : vector<2x8xf32> to vector<2xf32>
    %8 = vector.shape_cast %7 : vector<2xf32> to vector<2x1xf32>
    %9 = vector.broadcast %8 : vector<2x1xf32> to vector<2x8xf32>
    %10 = arith.subf %6, %9 : vector<2x8xf32>
    %11 = math.exp %10 : vector<2x8xf32>
    %cst_6 = arith.constant dense<0.000000e+00> : vector<2xf32>
    %12 = vector.multi_reduction <add>, %11, %cst_6 [1] : vector<2x8xf32> to vector<2xf32>
    %13 = vector.shape_cast %12 : vector<2xf32> to vector<2x1xf32>
    %14 = vector.broadcast %13 : vector<2x1xf32> to vector<2x8xf32>
    %15 = arith.divf %11, %14 : vector<2x8xf32>
    %16 = vector.shape_cast %15 : vector<2x8xf32> to vector<2x1x8xf32>
    %c0_7 = arith.constant 0 : index
    %c0_8 = arith.constant 0 : index
    %c0_9 = arith.constant 0 : index
    %17 = vector.load %arg3[%c0_7, %c0_8, %c0_9] : memref<2x1x8xf32, #tpu.memory_space<vmem>>, vector<2x1x8xf32>
    tpu.vector_store %arg3[%c0_7, %c0_8, %c0_9], %16 {strides = array<i32>} : memref<2x1x8xf32, #tpu.memory_space<vmem>>, vector<2x1x8xf32>,
    return
  }
  func.func @transform_0(%arg0: i32) -> (i32, i32, i32) {
    %c0_i32 = arith.constant 0 : i32
    %c0_i32_0 = arith.constant 0 : i32
    %c0_i32_1 = arith.constant 0 : i32
    return %arg0, %c0_i32, %c0_i32_0 : i32, i32, i32
  }
  func.func @transform_1(%arg0: i32) -> (i32, i32, i32) {
    %c0_i32 = arith.constant 0 : i32
    %c0_i32_0 = arith.constant 0 : i32
    %c0_i32_1 = arith.constant 0 : i32
    return %arg0, %c0_i32, %c0_i32_0 : i32, i32, i32
  }
  func.func @transform_2(%arg0: i32) -> (i32, i32, i32) {
    %c0_i32 = arith.constant 0 : i32
    %c0_i32_0 = arith.constant 0 : i32
    %c0_i32_1 = arith.constant 0 : i32
    return %arg0, %c0_i32, %c0_i32_0 : i32, i32, i32
  }
}

module attributes {stable_mosaic.version = 11 : i64} {
  func.func @_dot_kernel(%arg0: i32, %arg1: memref<2x1x32xf32, #tpu.memory_space<vmem>>, %arg2: memref<2x8x32xf32, #tpu.memory_space<vmem>>, %arg3: memref<2x1x8xf32, #tpu.memory_space<vmem>>) attributes {dimension_semantics = [#tpu.dimension_semantics<parallel>], iteration_bounds = array<i64: 1>, scalar_prefetch = 0 : i64, scratch_operands = 0 : i64, tpu.core_type = #tpu.core_type<tc>, window_params = [{transform_indices = @transform_0, window_bounds = array<i64: 2, 1, 32>}, {transform_indices = @transform_1, window_bounds = array<i64: 2, 8, 32>}, {transform_indices = @transform_2, window_bounds = array<i64: 2, 1, 8>}]} {
    %c0 = arith.constant 0 : index
    %c0_0 = arith.constant 0 : index
    %c0_1 = arith.constant 0 : index
    %0 = vector.load %arg1[%c0, %c0_0, %c0_1] : memref<2x1x32xf32, #tpu.memory_space<vmem>>, vector<2x1x32xf32>
    %1 = vector.shape_cast %0 : vector<2x1x32xf32> to vector<2x32xf32>
    %c0_2 = arith.constant 0 : index
    %c0_3 = arith.constant 0 : index
    %c0_4 = arith.constant 0 : index
    %2 = vector.load %arg2[%c0_2, %c0_3, %c0_4] : memref<2x8x32xf32, #tpu.memory_space<vmem>>, vector<2x8x32xf32>
    %3 = vector.shape_cast %1 : vector<2x32xf32> to vector<2x1x32xf32>
    %4 = vector.broadcast %3 : vector<2x1x32xf32> to vector<2x8x32xf32>
    %5 = arith.mulf %4, %2 : vector<2x8x32xf32>
    %cst = arith.constant dense<0.000000e+00> : vector<2x8xf32>
    %6 = vector.multi_reduction <add>, %5, %cst [2] : vector<2x8x32xf32> to vector<2x8xf32>
    %cst_5 = arith.constant dense<0xFF800000> : vector<2xf32>
    %7 = vector.multi_reduction <maximumf>, %6, %cst_5 [1] : vector<2x8xf32> to vector<2xf32>
    %8 = vector.shape_cast %7 : vector<2xf32> to vector<2x1xf32>
    %9 = vector.broadcast %8 : vector<2x1xf32> to vector<2x8xf32>
    %10 = arith.subf %6, %9 : vector<2x8xf32>
    %11 = math.exp %10 : vector<2x8xf32>
    %cst_6 = arith.constant dense<0.000000e+00> : vector<2xf32>
    %12 = vector.multi_reduction <add>, %11, %cst_6 [1] : vector<2x8xf32> to vector<2xf32>
    %13 = vector.shape_cast %12 : vector<2xf32> to vector<2x1xf32>
    %14 = vector.broadcast %13 : vector<2x1xf32> to vector<2x8xf32>
    %15 = arith.divf %11, %14 : vector<2x8xf32>
    %16 = vector.shape_cast %15 : vector<2x8xf32> to vector<2x1x8xf32>
    %c0_7 = arith.constant 0 : index
    %c0_8 = arith.constant 0 : index
    %c0_9 = arith.constant 0 : index
    %17 = vector.load %arg3[%c0_7, %c0_8, %c0_9] : memref<2x1x8xf32, #tpu.memory_space<vmem>>, vector<2x1x8xf32>
    tpu.vector_store %arg3[%c0_7, %c0_8, %c0_9], %16 {strides = array<i32>} : memref<2x1x8xf32, #tpu.memory_space<vmem>>, vector<2x1x8xf32>,
    return
  }
  func.func @transform_0(%arg0: i32) -> (i32, i32, i32) {
    %c0_i32 = arith.constant 0 : i32
    %c0_i32_0 = arith.constant 0 : i32
    %c0_i32_1 = arith.constant 0 : i32
    return %arg0, %c0_i32, %c0_i32_0 : i32, i32, i32
  }
  func.func @transform_1(%arg0: i32) -> (i32, i32, i32) {
    %c0_i32 = arith.constant 0 : i32
    %c0_i32_0 = arith.constant 0 : i32
    %c0_i32_1 = arith.constant 0 : i32
    return %arg0, %c0_i32, %c0_i32_0 : i32, i32, i32
  }
  func.func @transform_2(%arg0: i32) -> (i32, i32, i32) {
    %c0_i32 = arith.constant 0 : i32
    %c0_i32_0 = arith.constant 0 : i32
    %c0_i32_1 = arith.constant 0 : i32
    return %arg0, %c0_i32, %c0_i32_0 : i32, i32, i32
  }
}

</mosaic_0001>

<llo_original>
// kernel: tpu_custom_call.1
$region0: #{tpu_custom_call.1}
  #allocation0 [shape = 'u32[]', space=smem, size = 0x4, offset = 0x4, fixed_abs, tag = 'smem constant byte address 0x4 - core index']
  #allocation1 [shape = 'u32[144,128]{1,0:T(1,128)}', space=vmem, size = 0x12000, scoped, tag = 'internal scratch']
  %s0 = inlined_call_operand.hbm [shape: f32[2,1,32], index: 0, kind: input, shape index: {}]
  %s1 = inlined_call_operand.hbm [shape: f32[2,8,32], index: 1, kind: input, shape index: {}]
  %s2 = inlined_call_operand.hbm [shape: f32[2,1,8], index: 2, kind: output, shape index: {}]
  %s3 = sld [smem:[#allocation0]]
  $region26: #{tpu_custom_call.1} parent=0
    _
  %s5 = ssub.s32 1, %s3
  %s6 = scalar_select 0, %s5, %s3
  $region1: #{tpu_custom_call.1} parent=0
    #allocation2 [shape = 'u8[1024]{0}', space=vmem, size = 0x400, scoped, tag = 'input window, operand 0, single buffered']
    #allocation3 [shape = 's32[1]{0}', space=sflag, size = 0x4, scoped, tag = 'scoped memory for tpu_custom_call.1']
    #allocation4 [shape = 's32[1]{0}', space=sflag, size = 0x4, scoped, tag = 'scoped memory for tpu_custom_call.1']
    #allocation5 [shape = 'u8[8192]{0}', space=vmem, size = 0x2000, scoped, tag = 'input window, operand 1, single buffered']
    #allocation6 [shape = 's32[1]{0}', space=sflag, size = 0x4, scoped, tag = 'scoped memory for tpu_custom_call.1']
    #allocation7 [shape = 'u8[1024]{0}', space=vmem, size = 0x400, scoped, tag = 'output window, operand 0, single buffered']
    %7 = vsyncpa [#allocation3], 0
    %8 = vsyncpa [#allocation6], 0
    %9 = vsyncpa [#allocation4], 0
    // Predicated region
    $region2: #{tpu_custom_call.1} parent=1 // pred_check
      _
    $region3: #{tpu_custom_call.1} parent=1 // pred_check_branch
      %11 = sbr.rel (0) target = $region5
    $region4: #{tpu_custom_call.1} parent=1 // pred_region
      %s13 = ssub.s32 32, 32
      %14 = vsyncadd [#allocation3], %s13
      %s15 = sshll.u32 [#allocation2], 4
      %s16 = int_to_ptr.vmem [resolvable:$true] %s15
      %21 = dma.hbm_to_vmem [thread:$0]  %s0, 32, %s16, [#allocation3], 16, 16, 1
    $region5: #{tpu_custom_call.1} parent=1 // pred_fallthru
      _
    // Predicated region
    $region6: #{tpu_custom_call.1} parent=1 // pred_check
      _
    $region7: #{tpu_custom_call.1} parent=1 // pred_check_branch
      %23 = sbr.rel (0) target = $region9
    $region8: #{tpu_custom_call.1} parent=1 // pred_region
      %s25 = ssub.s32 256, 256
      %26 = vsyncadd [#allocation6], %s25
      %s27 = sshll.u32 [#allocation5], 4
      %s28 = int_to_ptr.vmem [resolvable:$true] %s27
      %33 = dma.hbm_to_vmem [thread:$0]  %s1, 256, %s28, [#allocation6], 128, 128, 8
    $region9: #{tpu_custom_call.1} parent=1 // pred_fallthru
      _
    // Predicated region
    $region10: #{tpu_custom_call.1} parent=1 // pred_check
      _
    $region11: #{tpu_custom_call.1} parent=1 // pred_check_branch
      %35 = sbr.rel (0) target = $region13
    $region12: #{tpu_custom_call.1} parent=1 // pred_region
      %36 = dma.done [#allocation3], 32
    $region13: #{tpu_custom_call.1} parent=1 // pred_fallthru
      _
    // Predicated region
    $region14: #{tpu_custom_call.1} parent=1 // pred_check
      _
    $region15: #{tpu_custom_call.1} parent=1 // pred_check_branch
      %38 = sbr.rel (0) target = $region17
    $region16: #{tpu_custom_call.1} parent=1 // pred_region
      %39 = dma.done [#allocation6], 256
    $region17: #{tpu_custom_call.1} parent=1 // pred_fallthru
      _
    %v40 = vld [vmem:[#allocation2] sm:$0x1]
    %v41 = vld [vmem:[#allocation2 + $0x1] sm:$0x1]
    %v42 = vld [vmem:[#allocation5] sm:$0xff]
    %v43 = vld [vmem:[#allocation5 + $0x8] sm:$0xff]
    %v46 = vlaneseq
    %v47 = vshrl.u32 %v46, 7
    %v48 = vsub.s32 0, %v47
    %v49 = vrot.slane %v40, %v48
    %v50 = vlaneseq
    %v51 = vshrl.u32 %v50, 7
    %v52 = vsub.s32 0, %v51
    %v53 = vrot.slane %v41, %v52
    %v56 = vmul.f32 %v49, %v42
    %v57 = vmul.f32 %v53, %v43
    %vm58 = vcmask 261120
    %v59 = vsel %vm58, %v56, 0.0
    %60 = vadd.xlane.f32.xlu0 %v59
    %v61 = vpop.xlane.xlu0 %60
    %v62 = vsel %vm58, %v57, 0.0
    %63 = vadd.xlane.f32.xlu0 %v62
    %v64 = vpop.xlane.xlu0 %63
    %v67 = vlaneseq
    %v68 = vand.u32 %v67, 127
    %v69 = vlaneseq
    %v70 = vshrl.u32 %v69, 7
    %v71 = vsub.s32 %v68, %v70
    %v72 = vrot.slane %v61, %v71
    %v73 = vlaneseq
    %v74 = vshrl.u32 %v73, 7
    %v75 = vsub.s32 %v68, %v74
    %v76 = vrot.slane %v64, %v75
    %vm77 = vcmask 1041409
    %v78 = vsel %vm77, %v76, %v72
    %vm80 = vcmask 58368
    %v81 = vsel %vm80, %v78, -inf
    %82 = vmax.xlane.f32.xlu0 %v81
    %v83 = vpop.xlane.xlu0 %82
    %v85 = vlaneseq
    %v86 = vshrl.u32 %v85, 7
    %v87 = vsub.s32 0, %v86
    %v88 = vrot.slane %v83, %v87
    %v89 = vlaneseq
    %v90 = vshrl.u32 %v89, 7
    %v91 = vsub.s32 1, %v90
    %v92 = vrot.slane %v83, %v91
    %v95 = vsub.f32 %v61, %v88
    %v96 = vsub.f32 %v64, %v92
    %v97 = vmul.f32 %v95, 1.442695
    %v98 = vpow.pop %v97
    %v99 = vmul.f32 %v96, 1.442695
    %v100 = vpow.pop %v99
    %103 = vset.pattern.permute.xlu0 0
    %104 = vperm.xlu0 %103, %v98
    %v105 = vpop.permute.xlu0 %104
    %106 = vset.pattern.permute.xlu0 0
    %107 = vperm.xlu0 %106, %v100
    %v108 = vpop.permute.xlu0 %107
    %v109 = vlaneseq
    %v110 = vshrl.u32 %v109, 7
    %v111 = vsub.s32 %v68, %v110
    %v112 = vrot.slane %v105, %v111
    %v113 = vlaneseq
    %v114 = vshrl.u32 %v113, 7
    %v115 = vsub.s32 %v68, %v114
    %v116 = vrot.slane %v108, %v115
    %v117 = vsel %vm77, %v116, %v112
    %v119 = vsel %vm80, %v117, 0.0
    %120 = vadd.xlane.f32.xlu0 %v119
    %v121 = vpop.xlane.xlu0 %120
    %v123 = vlaneseq
    %v124 = vshrl.u32 %v123, 7
    %v125 = vsub.s32 0, %v124
    %v126 = vrot.slane %v121, %v125
    %v127 = vlaneseq
    %v128 = vshrl.u32 %v127, 7
    %v129 = vsub.s32 1, %v128
    %v130 = vrot.slane %v121, %v129
    %v133 = vrcp.pop %v126
    %v134 = vmul.f32 %v98, %v133
    %v135 = vrcp.pop %v130
    %v136 = vmul.f32 %v100, %v135
    %139 = vset.pattern.permute.xlu0 0
    %140 = vperm.xlu0 %139, %v134
    %v141 = vpop.permute.xlu0 %140
    %142 = vset.pattern.permute.xlu0 0
    %143 = vperm.xlu0 %142, %v136
    %v144 = vpop.permute.xlu0 %143
    %v145 = vlaneseq
    %v146 = vshrl.u32 %v145, 7
    %v147 = vsub.s32 %v68, %v146
    %v148 = vrot.slane %v141, %v147
    %v149 = vlaneseq
    %v150 = vshrl.u32 %v149, 7
    %v151 = vsub.s32 %v68, %v150
    %v152 = vrot.slane %v144, %v151
    %vm155 = vcmask 57344
    %156 = vst.msk [vmem:[#allocation7] sm:$0x1] %vm155, %v148
    %157 = vst.msk [vmem:[#allocation7 + $0x1] sm:$0x1] %vm155, %v152
    // Predicated region
    $region18: #{tpu_custom_call.1} parent=1 // pred_check
      _
    $region19: #{tpu_custom_call.1} parent=1 // pred_check_branch
      %159 = sbr.rel (0) target = $region21
    $region20: #{tpu_custom_call.1} parent=1 // pred_region
      %s161 = ssub.s32 32, 32
      %162 = vsyncadd [#allocation4], %s161
      %s163 = sshll.u32 [#allocation7], 4
      %s164 = int_to_ptr.vmem [resolvable:$true] %s163
      %169 = dma.vmem_to_hbm [thread:$0]  %s164, 32, %s2, [#allocation4], 16, 16, 1
    $region21: #{tpu_custom_call.1} parent=1 // pred_fallthru
      _
    // Predicated region
    $region22: #{tpu_custom_call.1} parent=1 // pred_check
      _
    $region23: #{tpu_custom_call.1} parent=1 // pred_check_branch
      %171 = sbr.rel (0) target = $region25
    $region24: #{tpu_custom_call.1} parent=1 // pred_region
      %172 = dma.done [#allocation4], 32
    $region25: #{tpu_custom_call.1} parent=1 // pred_fallthru
      _
    %173 = vsyncpa [#allocation3], 1
    %174 = vsyncpa [#allocation6], 1
    %175 = vsyncpa [#allocation4], 1

// kernel: tpu_custom_call.1
$region0: #{tpu_custom_call.1}
  #allocation0 [shape = 'u32[]', space=smem, size = 0x4, offset = 0x4, fixed_abs, tag = 'smem constant byte address 0x4 - core index']
  #allocation1 [shape = 'u32[144,128]{1,0:T(1,128)}', space=vmem, size = 0x12000, scoped, tag = 'internal scratch']
  %s0 = inlined_call_operand.hbm [shape: f32[2,1,32], index: 0, kind: input, shape index: {}]
  %s1 = inlined_call_operand.hbm [shape: f32[2,8,32], index: 1, kind: input, shape index: {}]
  %s2 = inlined_call_operand.hbm [shape: f32[2,1,8], index: 2, kind: output, shape index: {}]
  %s3 = sld [smem:[#allocation0]]
  $region26: #{tpu_custom_call.1} parent=0
    _
  %s5 = ssub.s32 1, %s3
  %s6 = scalar_select 0, %s5, %s3
  $region1: #{tpu_custom_call.1} parent=0
    #allocation2 [shape = 'u8[1024]{0}', space=vmem, size = 0x400, scoped, tag = 'input window, operand 0, single buffered']
    #allocation3 [shape = 's32[1]{0}', space=sflag, size = 0x4, scoped, tag = 'scoped memory for tpu_custom_call.1']
    #allocation4 [shape = 's32[1]{0}', space=sflag, size = 0x4, scoped, tag = 'scoped memory for tpu_custom_call.1']
    #allocation5 [shape = 'u8[8192]{0}', space=vmem, size = 0x2000, scoped, tag = 'input window, operand 1, single buffered']
    #allocation6 [shape = 's32[1]{0}', space=sflag, size = 0x4, scoped, tag = 'scoped memory for tpu_custom_call.1']
    #allocation7 [shape = 'u8[1024]{0}', space=vmem, size = 0x400, scoped, tag = 'output window, operand 0, single buffered']
    %7 = vsyncpa [#allocation3], 0
    %8 = vsyncpa [#allocation6], 0
    %9 = vsyncpa [#allocation4], 0
    // Predicated region
    $region2: #{tpu_custom_call.1} parent=1 // pred_check
      _
    $region3: #{tpu_custom_call.1} parent=1 // pred_check_branch
      %11 = sbr.rel (0) target = $region5
    $region4: #{tpu_custom_call.1} parent=1 // pred_region
      %s13 = ssub.s32 32, 32
      %14 = vsyncadd [#allocation3], %s13
      %s15 = sshll.u32 [#allocation2], 4
      %s16 = int_to_ptr.vmem [resolvable:$true] %s15
      %21 = dma.hbm_to_vmem [thread:$0]  %s0, 32, %s16, [#allocation3], 16, 16, 1
    $region5: #{tpu_custom_call.1} parent=1 // pred_fallthru
      _
    // Predicated region
    $region6: #{tpu_custom_call.1} parent=1 // pred_check
      _
    $region7: #{tpu_custom_call.1} parent=1 // pred_check_branch
      %23 = sbr.rel (0) target = $region9
    $region8: #{tpu_custom_call.1} parent=1 // pred_region
      %s25 = ssub.s32 256, 256
      %26 = vsyncadd [#allocation6], %s25
      %s27 = sshll.u32 [#allocation5], 4
      %s28 = int_to_ptr.vmem [resolvable:$true] %s27
      %33 = dma.hbm_to_vmem [thread:$0]  %s1, 256, %s28, [#allocation6], 128, 128, 8
    $region9: #{tpu_custom_call.1} parent=1 // pred_fallthru
      _
    // Predicated region
    $region10: #{tpu_custom_call.1} parent=1 // pred_check
      _
    $region11: #{tpu_custom_call.1} parent=1 // pred_check_branch
      %35 = sbr.rel (0) target = $region13
    $region12: #{tpu_custom_call.1} parent=1 // pred_region
      %36 = dma.done [#allocation3], 32
    $region13: #{tpu_custom_call.1} parent=1 // pred_fallthru
      _
    // Predicated region
    $region14: #{tpu_custom_call.1} parent=1 // pred_check
      _
    $region15: #{tpu_custom_call.1} parent=1 // pred_check_branch
      %38 = sbr.rel (0) target = $region17
    $region16: #{tpu_custom_call.1} parent=1 // pred_region
      %39 = dma.done [#allocation6], 256
    $region17: #{tpu_custom_call.1} parent=1 // pred_fallthru
      _
    %v40 = vld [vmem:[#allocation2] sm:$0x1]
    %v41 = vld [vmem:[#allocation2 + $0x1] sm:$0x1]
    %v42 = vld [vmem:[#allocation5] sm:$0xff]
    %v43 = vld [vmem:[#allocation5 + $0x8] sm:$0xff]
    %v46 = vlaneseq
    %v47 = vshrl.u32 %v46, 7
    %v48 = vsub.s32 0, %v47
    %v49 = vrot.slane %v40, %v48
    %v50 = vlaneseq
    %v51 = vshrl.u32 %v50, 7
    %v52 = vsub.s32 0, %v51
    %v53 = vrot.slane %v41, %v52
    %v56 = vmul.f32 %v49, %v42
    %v57 = vmul.f32 %v53, %v43
    %vm58 = vcmask 261120
    %v59 = vsel %vm58, %v56, 0.0
    %60 = vadd.xlane.f32.xlu0 %v59
    %v61 = vpop.xlane.xlu0 %60
    %v62 = vsel %vm58, %v57, 0.0
    %63 = vadd.xlane.f32.xlu0 %v62
    %v64 = vpop.xlane.xlu0 %63
    %v67 = vlaneseq
    %v68 = vand.u32 %v67, 127
    %v69 = vlaneseq
    %v70 = vshrl.u32 %v69, 7
    %v71 = vsub.s32 %v68, %v70
    %v72 = vrot.slane %v61, %v71
    %v73 = vlaneseq
    %v74 = vshrl.u32 %v73, 7
    %v75 = vsub.s32 %v68, %v74
    %v76 = vrot.slane %v64, %v75
    %vm77 = vcmask 1041409
    %v78 = vsel %vm77, %v76, %v72
    %vm80 = vcmask 58368
    %v81 = vsel %vm80, %v78, -inf
    %82 = vmax.xlane.f32.xlu0 %v81
    %v83 = vpop.xlane.xlu0 %82
    %v85 = vlaneseq
    %v86 = vshrl.u32 %v85, 7
    %v87 = vsub.s32 0, %v86
    %v88 = vrot.slane %v83, %v87
    %v89 = vlaneseq
    %v90 = vshrl.u32 %v89, 7
    %v91 = vsub.s32 1, %v90
    %v92 = vrot.slane %v83, %v91
    %v95 = vsub.f32 %v61, %v88
    %v96 = vsub.f32 %v64, %v92
    %v97 = vmul.f32 %v95, 1.442695
    %v98 = vpow.pop %v97
    %v99 = vmul.f32 %v96, 1.442695
    %v100 = vpow.pop %v99
    %103 = vset.pattern.permute.xlu0 0
    %104 = vperm.xlu0 %103, %v98
    %v105 = vpop.permute.xlu0 %104
    %106 = vset.pattern.permute.xlu0 0
    %107 = vperm.xlu0 %106, %v100
    %v108 = vpop.permute.xlu0 %107
    %v109 = vlaneseq
    %v110 = vshrl.u32 %v109, 7
    %v111 = vsub.s32 %v68, %v110
    %v112 = vrot.slane %v105, %v111
    %v113 = vlaneseq
    %v114 = vshrl.u32 %v113, 7
    %v115 = vsub.s32 %v68, %v114
    %v116 = vrot.slane %v108, %v115
    %v117 = vsel %vm77, %v116, %v112
    %v119 = vsel %vm80, %v117, 0.0
    %120 = vadd.xlane.f32.xlu0 %v119
    %v121 = vpop.xlane.xlu0 %120
    %v123 = vlaneseq
    %v124 = vshrl.u32 %v123, 7
    %v125 = vsub.s32 0, %v124
    %v126 = vrot.slane %v121, %v125
    %v127 = vlaneseq
    %v128 = vshrl.u32 %v127, 7
    %v129 = vsub.s32 1, %v128
    %v130 = vrot.slane %v121, %v129
    %v133 = vrcp.pop %v126
    %v134 = vmul.f32 %v98, %v133
    %v135 = vrcp.pop %v130
    %v136 = vmul.f32 %v100, %v135
    %139 = vset.pattern.permute.xlu0 0
    %140 = vperm.xlu0 %139, %v134
    %v141 = vpop.permute.xlu0 %140
    %142 = vset.pattern.permute.xlu0 0
    %143 = vperm.xlu0 %142, %v136
    %v144 = vpop.permute.xlu0 %143
    %v145 = vlaneseq
    %v146 = vshrl.u32 %v145, 7
    %v147 = vsub.s32 %v68, %v146
    %v148 = vrot.slane %v141, %v147
    %v149 = vlaneseq
    %v150 = vshrl.u32 %v149, 7
    %v151 = vsub.s32 %v68, %v150
    %v152 = vrot.slane %v144, %v151
    %vm155 = vcmask 57344
    %156 = vst.msk [vmem:[#allocation7] sm:$0x1] %vm155, %v148
    %157 = vst.msk [vmem:[#allocation7 + $0x1] sm:$0x1] %vm155, %v152
    // Predicated region
    $region18: #{tpu_custom_call.1} parent=1 // pred_check
      _
    $region19: #{tpu_custom_call.1} parent=1 // pred_check_branch
      %159 = sbr.rel (0) target = $region21
    $region20: #{tpu_custom_call.1} parent=1 // pred_region
      %s161 = ssub.s32 32, 32
      %162 = vsyncadd [#allocation4], %s161
      %s163 = sshll.u32 [#allocation7], 4
      %s164 = int_to_ptr.vmem [resolvable:$true] %s163
      %169 = dma.vmem_to_hbm [thread:$0]  %s164, 32, %s2, [#allocation4], 16, 16, 1
    $region21: #{tpu_custom_call.1} parent=1 // pred_fallthru
      _
    // Predicated region
    $region22: #{tpu_custom_call.1} parent=1 // pred_check
      _
    $region23: #{tpu_custom_call.1} parent=1 // pred_check_branch
      %171 = sbr.rel (0) target = $region25
    $region24: #{tpu_custom_call.1} parent=1 // pred_region
      %172 = dma.done [#allocation4], 32
    $region25: #{tpu_custom_call.1} parent=1 // pred_fallthru
      _
    %173 = vsyncpa [#allocation3], 1
    %174 = vsyncpa [#allocation6], 1
    %175 = vsyncpa [#allocation4], 1

</llo_original>
